<compile_context>
chip_gen: v5e
topology: v5e:2x2
jax: 0.10.0
libtpu: 0.0.40
codegen_flags: <defaults>
</compile_context>

<pallas_src>
import jax
import jax.numpy as jnp
from jax.experimental import pallas as pl
from jax.experimental.pallas import tpu as pltpu


HIDDEN_PAD = 128  # hidden dims (20, 10, 20) zero-padded to one lane-dense width


def _round_up(n, m):
    return ((n + m - 1) // m) * m


def _pad2d(a, rows, cols, dtype):
    out = jnp.zeros((rows, cols), dtype)
    return out.at[: a.shape[0], : a.shape[1]].set(a.astype(dtype))


def sae_kernel(x_ref,
               w1_ref, b1_ref,
               w2_ref, b2_ref,
               w3_ref, b3_ref,
               w4_ref, b4_ref,
               out_ref):
    """One batch tile of the SAE forward.

    x_ref:   [TILE_B, F_pad]   bf16 (streamed per grid step)
    w*_ref:  bf16 weights, [in, out], zero-padded lane-dense (VMEM-resident)
    b*_ref:  [1, out]          f32 biases
    out_ref: [TILE_B, F_pad]   f32
    """
    x = x_ref[...]

    # encode
    h1 = jax.nn.sigmoid(
        jnp.dot(x, w1_ref[...], preferred_element_type=jnp.float32)
        + b1_ref[...])
    h2 = jax.nn.sigmoid(
        jnp.dot(h1.astype(jnp.bfloat16), w2_ref[...],
                preferred_element_type=jnp.float32)
        + b2_ref[...])
    # decode
    h3 = jax.nn.sigmoid(
        jnp.dot(h2.astype(jnp.bfloat16), w3_ref[...],
                preferred_element_type=jnp.float32)
        + b3_ref[...])
    out = (jnp.dot(h3.astype(jnp.bfloat16), w4_ref[...],
                   preferred_element_type=jnp.float32)
           + b4_ref[...])

    out_ref[...] = out.astype(out_ref.dtype)


def prepare_padded_params(params, f_pad, h_pad=HIDDEN_PAD):
    """Zero-pad to lane-dense shapes; weights bf16, biases f32."""
    w1, b1 = params["fc1"]
    w2, b2 = params["fc2"]
    w3, b3 = params["fc3"]
    w4, b4 = params["fc4"]
    w1p = _pad2d(w1, f_pad, h_pad, jnp.bfloat16)
    w2p = _pad2d(w2, h_pad, h_pad, jnp.bfloat16)
    w3p = _pad2d(w3, h_pad, h_pad, jnp.bfloat16)
    w4p = _pad2d(w4, h_pad, f_pad, jnp.bfloat16)
    b1p = _pad2d(b1, 1, h_pad, jnp.float32)
    b2p = _pad2d(b2, 1, h_pad, jnp.float32)
    b3p = _pad2d(b3, 1, h_pad, jnp.float32)
    b4p = _pad2d(b4, 1, f_pad, jnp.float32)
    return w1p, b1p, w2p, b2p, w3p, b3p, w4p, b4p


def sae_forward(x, params, *, tile_b=None, vmem_budget_bytes=16 * 1024 * 1024):
    """x: [B, nb_movies] f32.  params: dict of (w [in,out], b [1,out]) f32."""
    B, F = x.shape
    f_pad = _round_up(F, 128)
    h_pad = HIDDEN_PAD

    if tile_b is None:
        # Largest batch tile whose double-buffered x (bf16) + out (f32) fits
        # comfortably in scoped VMEM on every generation (v7x: 64 MiB phys /
        # 32 MiB scoped default -> stay well below).  v6e/v5e could go bigger.
        bytes_per_row = f_pad * (2 + 4) * 2  # bf16 in + f32 out, double buffered
        tile_b = max(16, min(512, (vmem_budget_bytes // bytes_per_row) // 16 * 16))
    tile_b = max(16, (tile_b // 16) * 16)       # bf16 packs 16 rows per sublane tile
    tile_b = min(tile_b, _round_up(B, 16))

    b_pad = _round_up(B, tile_b)

    # Host-side padding: lane-dense feature dim, batch padded to the tile.
    xp = jnp.zeros((b_pad, f_pad), jnp.bfloat16)
    xp = xp.at[:B, :F].set(x.astype(jnp.bfloat16))

    w1p, b1p, w2p, b2p, w3p, b3p, w4p, b4p = prepare_padded_params(
        params, f_pad, h_pad)

    def const(shape):
        # Constant block index -> the buffer stays resident across grid steps.
        return pl.BlockSpec(shape, lambda i: (0, 0))

    in_specs = [
        pl.BlockSpec((tile_b, f_pad), lambda i: (i, 0)),   # x: streamed per tile
        const((f_pad, h_pad)), const((1, h_pad)),          # fc1
        const((h_pad, h_pad)), const((1, h_pad)),          # fc2
        const((h_pad, h_pad)), const((1, h_pad)),          # fc3
        const((h_pad, f_pad)), const((1, f_pad)),          # fc4
    ]
    out_specs = pl.BlockSpec((tile_b, f_pad), lambda i: (i, 0))

    flops = 2 * b_pad * (2 * f_pad * h_pad + 2 * h_pad * h_pad)
    transcendentals = 3 * b_pad * h_pad
    bytes_accessed = (
        b_pad * f_pad * (2 + 4)                          # x bf16 in + f32 out
        + (2 * f_pad * h_pad + 2 * h_pad * h_pad) * 2    # bf16 weights
        + (3 * h_pad + f_pad) * 4)                       # f32 biases

    out_padded = pl.pallas_call(
        sae_kernel,
        out_shape=jax.ShapeDtypeStruct((b_pad, f_pad), jnp.float32),
        grid=(b_pad // tile_b,),
        in_specs=in_specs,
        out_specs=out_specs,
        compiler_params=pltpu.CompilerParams(
            dimension_semantics=("parallel",)),
        cost_estimate=pl.CostEstimate(
            flops=flops,
            transcendentals=transcendentals,
            bytes_accessed=bytes_accessed),
    )(xp, w1p, b1p, w2p, b2p, w3p, b3p, w4p, b4p)

    return out_padded[:B, :F]


def init_linear(key, in_f, out_f):
    """PyTorch-style init: U(-1/sqrt(in), 1/sqrt(in)).

    Weight is stored [in_f, out_f] (transposed vs. nn.Linear) so the kernel
    computes x @ W + b, numerically identical to x @ weight.T + bias.
    """
    kw, kb = jax.random.split(key)
    bound = 1.0 / jnp.sqrt(jnp.float32(in_f))
    w = jax.random.uniform(kw, (in_f, out_f), jnp.float32, -bound, bound)
    b = jax.random.uniform(kb, (1, out_f), jnp.float32, -bound, bound)
    return w, b


def sae_reference_f32(x, params):
    """Pure-f32 JAX reference (semantic check, loose tolerance vs bf16 kernel)."""
    w1, b1 = params["fc1"]
    w2, b2 = params["fc2"]
    w3, b3 = params["fc3"]
    w4, b4 = params["fc4"]
    h = jax.nn.sigmoid(x @ w1 + b1)
    h = jax.nn.sigmoid(h @ w2 + b2)
    h = jax.nn.sigmoid(h @ w3 + b3)
    return h @ w4 + b4


def sae_reference_matched(x, params):
    """Matched-precision reference: bf16 matmul inputs, f32 accumulation."""
    def dot(a, w):
        return jnp.dot(a.astype(jnp.bfloat16), w.astype(jnp.bfloat16),
                       preferred_element_type=jnp.float32)
    w1, b1 = params["fc1"]
    w2, b2 = params["fc2"]
    w3, b3 = params["fc3"]
    w4, b4 = params["fc4"]
    h = jax.nn.sigmoid(dot(x, w1) + b1)
    h = jax.nn.sigmoid(dot(h, w2) + b2)
    h = jax.nn.sigmoid(dot(h, w3) + b3)
    return dot(h, w4) + b4


if __name__ == "__main__":
    nb_movies = 200   # deliberately not a multiple of 128 (exercises padding)
    batch = 40        # deliberately not a multiple of the batch tile

    root = jax.random.PRNGKey(0)
    k_x, k1, k2, k3, k4 = jax.random.split(root, 5)

    params = {
        "fc1": init_linear(k1, nb_movies, 20),
        "fc2": init_linear(k2, 20, 10),
        "fc3": init_linear(k3, 10, 20),
        "fc4": init_linear(k4, 20, nb_movies),
    }

    x = jax.random.normal(k_x, (batch, nb_movies), jnp.float32)

    # tile_b=16 -> 3 grid steps at these shapes (real workloads use the
    # auto-derived, VMEM-budgeted tile by passing tile_b=None).
    out = sae_forward(x, params, tile_b=16)
    out = jax.block_until_ready(out)
    assert out.shape == (batch, nb_movies)

    ref_matched = sae_reference_matched(x, params)
    assert jnp.allclose(out, ref_matched, atol=5e-3, rtol=1e-3), \
        "mismatch vs matched-precision (bf16-in / f32-acc) reference"

    ref_f32 = sae_reference_f32(x, params)
    assert jnp.allclose(out, ref_f32, atol=3e-2, rtol=3e-2), \
        "mismatch vs f32 reference"

    print("KERNEL_OK")
</pallas_src>

<mosaic_0001>
module attributes {stable_mosaic.version = 11 : i64} {
  func.func @sae_kernel(%arg0: i32, %arg1: memref<16x256xbf16, #tpu.memory_space<vmem>>, %arg2: memref<256x128xbf16, #tpu.memory_space<vmem>>, %arg3: memref<1x128xf32, #tpu.memory_space<vmem>>, %arg4: memref<128x128xbf16, #tpu.memory_space<vmem>>, %arg5: memref<1x128xf32, #tpu.memory_space<vmem>>, %arg6: memref<128x128xbf16, #tpu.memory_space<vmem>>, %arg7: memref<1x128xf32, #tpu.memory_space<vmem>>, %arg8: memref<128x256xbf16, #tpu.memory_space<vmem>>, %arg9: memref<1x256xf32, #tpu.memory_space<vmem>>, %arg10: memref<16x256xf32, #tpu.memory_space<vmem>>) attributes {dimension_semantics = [#tpu.dimension_semantics<parallel>], iteration_bounds = array<i64: 3>, scalar_prefetch = 0 : i64, scratch_operands = 0 : i64, tpu.core_type = #tpu.core_type<tc>, window_params = [{transform_indices = @transform_0, window_bounds = array<i64: 16, 256>}, {pipeline_mode = #tpu.pipeline_mode<synchronous>, transform_indices = @transform_1, window_bounds = array<i64: 256, 128>}, {pipeline_mode = #tpu.pipeline_mode<synchronous>, transform_indices = @transform_2, window_bounds = array<i64: 1, 128>}, {pipeline_mode = #tpu.pipeline_mode<synchronous>, transform_indices = @transform_3, window_bounds = array<i64: 128, 128>}, {pipeline_mode = #tpu.pipeline_mode<synchronous>, transform_indices = @transform_4, window_bounds = array<i64: 1, 128>}, {pipeline_mode = #tpu.pipeline_mode<synchronous>, transform_indices = @transform_5, window_bounds = array<i64: 128, 128>}, {pipeline_mode = #tpu.pipeline_mode<synchronous>, transform_indices = @transform_6, window_bounds = array<i64: 1, 128>}, {pipeline_mode = #tpu.pipeline_mode<synchronous>, transform_indices = @transform_7, window_bounds = array<i64: 128, 256>}, {pipeline_mode = #tpu.pipeline_mode<synchronous>, transform_indices = @transform_8, window_bounds = array<i64: 1, 256>}, {transform_indices = @transform_9, window_bounds = array<i64: 16, 256>}]} {
    %c0 = arith.constant 0 : index
    %c0_0 = arith.constant 0 : index
    %0 = vector.load %arg1[%c0, %c0_0] : memref<16x256xbf16, #tpu.memory_space<vmem>>, vector<16x256xbf16>
    %c0_1 = arith.constant 0 : index
    %c0_2 = arith.constant 0 : index
    %1 = vector.load %arg2[%c0_1, %c0_2] : memref<256x128xbf16, #tpu.memory_space<vmem>>, vector<256x128xbf16>
    %cst = arith.constant dense<0.000000e+00> : vector<16x128xf32>
    %2 = tpu.matmul %0, %1, %cst {dimension_numbers = #tpu.dot_dimension_numbers<[1], [0], [0], [1], [0, 0, 1, 1], [], []>} : vector<16x256xbf16>, vector<256x128xbf16>, vector<16x128xf32> -> vector<16x128xf32>
    %c0_3 = arith.constant 0 : index
    %c0_4 = arith.constant 0 : index
    %3 = vector.load %arg3[%c0_3, %c0_4] : memref<1x128xf32, #tpu.memory_space<vmem>>, vector<1x128xf32>
    %4 = vector.broadcast %3 : vector<1x128xf32> to vector<16x128xf32>
    %5 = arith.addf %2, %4 : vector<16x128xf32>
    %6 = arith.negf %5 : vector<16x128xf32>
    %7 = math.exp %6 : vector<16x128xf32>
    %cst_5 = arith.constant 1.000000e+00 : f32
    %8 = vector.broadcast %cst_5 : f32 to vector<16x128xf32>
    %9 = arith.addf %8, %7 : vector<16x128xf32>
    %10 = arith.divf %8, %9 : vector<16x128xf32>
    %11 = arith.truncf %10 : vector<16x128xf32> to vector<16x128xbf16>
    %c0_6 = arith.constant 0 : index
    %c0_7 = arith.constant 0 : index
    %12 = vector.load %arg4[%c0_6, %c0_7] : memref<128x128xbf16, #tpu.memory_space<vmem>>, vector<128x128xbf16>
    %cst_8 = arith.constant dense<0.000000e+00> : vector<16x128xf32>
    %13 = tpu.matmul %11, %12, %cst_8 {dimension_numbers = #tpu.dot_dimension_numbers<[1], [0], [0], [1], [0, 0, 1, 1], [], []>} : vector<16x128xbf16>, vector<128x128xbf16>, vector<16x128xf32> -> vector<16x128xf32>
    %c0_9 = arith.constant 0 : index
    %c0_10 = arith.constant 0 : index
    %14 = vector.load %arg5[%c0_9, %c0_10] : memref<1x128xf32, #tpu.memory_space<vmem>>, vector<1x128xf32>
    %15 = vector.broadcast %14 : vector<1x128xf32> to vector<16x128xf32>
    %16 = arith.addf %13, %15 : vector<16x128xf32>
    %17 = arith.negf %16 : vector<16x128xf32>
    %18 = math.exp %17 : vector<16x128xf32>
    %cst_11 = arith.constant 1.000000e+00 : f32
    %19 = vector.broadcast %cst_11 : f32 to vector<16x128xf32>
    %20 = arith.addf %19, %18 : vector<16x128xf32>
    %21 = arith.divf %19, %20 : vector<16x128xf32>
    %22 = arith.truncf %21 : vector<16x128xf32> to vector<16x128xbf16>
    %c0_12 = arith.constant 0 : index
    %c0_13 = arith.constant 0 : index
    %23 = vector.load %arg6[%c0_12, %c0_13] : memref<128x128xbf16, #tpu.memory_space<vmem>>, vector<128x128xbf16>
    %cst_14 = arith.constant dense<0.000000e+00> : vector<16x128xf32>
    %24 = tpu.matmul %22, %23, %cst_14 {dimension_numbers = #tpu.dot_dimension_numbers<[1], [0], [0], [1], [0, 0, 1, 1], [], []>} : vector<16x128xbf16>, vector<128x128xbf16>, vector<16x128xf32> -> vector<16x128xf32>
    %c0_15 = arith.constant 0 : index
    %c0_16 = arith.constant 0 : index
    %25 = vector.load %arg7[%c0_15, %c0_16] : memref<1x128xf32, #tpu.memory_space<vmem>>, vector<1x128xf32>
    %26 = vector.broadcast %25 : vector<1x128xf32> to vector<16x128xf32>
    %27 = arith.addf %24, %26 : vector<16x128xf32>
    %28 = arith.negf %27 : vector<16x128xf32>
    %29 = math.exp %28 : vector<16x128xf32>
    %cst_17 = arith.constant 1.000000e+00 : f32
    %30 = vector.broadcast %cst_17 : f32 to vector<16x128xf32>
    %31 = arith.addf %30, %29 : vector<16x128xf32>
    %32 = arith.divf %30, %31 : vector<16x128xf32>
    %33 = arith.truncf %32 : vector<16x128xf32> to vector<16x128xbf16>
    %c0_18 = arith.constant 0 : index
    %c0_19 = arith.constant 0 : index
    %34 = vector.load %arg8[%c0_18, %c0_19] : memref<128x256xbf16, #tpu.memory_space<vmem>>, vector<128x256xbf16>
    %cst_20 = arith.constant dense<0.000000e+00> : vector<16x256xf32>
    %35 = tpu.matmul %33, %34, %cst_20 {dimension_numbers = #tpu.dot_dimension_numbers<[1], [0], [0], [1], [0, 0, 1, 1], [], []>} : vector<16x128xbf16>, vector<128x256xbf16>, vector<16x256xf32> -> vector<16x256xf32>
    %c0_21 = arith.constant 0 : index
    %c0_22 = arith.constant 0 : index
    %36 = vector.load %arg9[%c0_21, %c0_22] : memref<1x256xf32, #tpu.memory_space<vmem>>, vector<1x256xf32>
    %37 = vector.broadcast %36 : vector<1x256xf32> to vector<16x256xf32>
    %38 = arith.addf %35, %37 : vector<16x256xf32>
    %c0_23 = arith.constant 0 : index
    %c0_24 = arith.constant 0 : index
    %39 = vector.load %arg10[%c0_23, %c0_24] : memref<16x256xf32, #tpu.memory_space<vmem>>, vector<16x256xf32>
    tpu.vector_store %arg10[%c0_23, %c0_24], %38 {strides = array<i32>} : memref<16x256xf32, #tpu.memory_space<vmem>>, vector<16x256xf32>,
    return
  }
  func.func @transform_0(%arg0: i32) -> (i32, i32) {
    %c0_i32 = arith.constant 0 : i32
    %c0_i32_0 = arith.constant 0 : i32
    return %arg0, %c0_i32 : i32, i32
  }
  func.func @transform_1(%arg0: i32) -> (i32, i32) {
    %c0_i32 = arith.constant 0 : i32
    %c0_i32_0 = arith.constant 0 : i32
    %c0_i32_1 = arith.constant 0 : i32
    return %c0_i32, %c0_i32_0 : i32, i32
  }
  func.func @transform_2(%arg0: i32) -> (i32, i32) {
    %c0_i32 = arith.constant 0 : i32
    %c0_i32_0 = arith.constant 0 : i32
    %c0_i32_1 = arith.constant 0 : i32
    return %c0_i32, %c0_i32_0 : i32, i32
  }
  func.func @transform_3(%arg0: i32) -> (i32, i32) {
    %c0_i32 = arith.constant 0 : i32
    %c0_i32_0 = arith.constant 0 : i32
    %c0_i32_1 = arith.constant 0 : i32
    return %c0_i32, %c0_i32_0 : i32, i32
  }
  func.func @transform_4(%arg0: i32) -> (i32, i32) {
    %c0_i32 = arith.constant 0 : i32
    %c0_i32_0 = arith.constant 0 : i32
    %c0_i32_1 = arith.constant 0 : i32
    return %c0_i32, %c0_i32_0 : i32, i32
  }
  func.func @transform_5(%arg0: i32) -> (i32, i32) {
    %c0_i32 = arith.constant 0 : i32
    %c0_i32_0 = arith.constant 0 : i32
    %c0_i32_1 = arith.constant 0 : i32
    return %c0_i32, %c0_i32_0 : i32, i32
  }
  func.func @transform_6(%arg0: i32) -> (i32, i32) {
    %c0_i32 = arith.constant 0 : i32
    %c0_i32_0 = arith.constant 0 : i32
    %c0_i32_1 = arith.constant 0 : i32
    return %c0_i32, %c0_i32_0 : i32, i32
  }
  func.func @transform_7(%arg0: i32) -> (i32, i32) {
    %c0_i32 = arith.constant 0 : i32
    %c0_i32_0 = arith.constant 0 : i32
    %c0_i32_1 = arith.constant 0 : i32
    return %c0_i32, %c0_i32_0 : i32, i32
  }
  func.func @transform_8(%arg0: i32) -> (i32, i32) {
    %c0_i32 = arith.constant 0 : i32
    %c0_i32_0 = arith.constant 0 : i32
    %c0_i32_1 = arith.constant 0 : i32
    return %c0_i32, %c0_i32_0 : i32, i32
  }
  func.func @transform_9(%arg0: i32) -> (i32, i32) {
    %c0_i32 = arith.constant 0 : i32
    %c0_i32_0 = arith.constant 0 : i32
    return %arg0, %c0_i32 : i32, i32
  }
}

</mosaic_0001>

<llo_original>
// kernel: tpu_custom_call.1
$region0: #{tpu_custom_call.1}
  #allocation0 [shape = 'u32[]', space=smem, size = 0x4, offset = 0x4, fixed_abs, tag = 'smem constant byte address 0x4 - core index']
  #allocation1 [shape = 'u32[72,128]{1,0:T(1,128)}', space=vmem, size = 0x9000, scoped, tag = 'internal scratch']
  %s0 = inlined_call_operand.hbm [shape: bf16[48,256], index: 0, kind: input, shape index: {}]
  %s1 = inlined_call_operand.hbm [shape: bf16[256,128], index: 1, kind: input, shape index: {}]
  %s2 = inlined_call_operand.vmem [shape: f32[1,128], index: 2, kind: input, shape index: {}]
  %s3 = inlined_call_operand.hbm [shape: bf16[128,128], index: 3, kind: input, shape index: {}]
  %s4 = inlined_call_operand.hbm [shape: f32[1,128], index: 4, kind: input, shape index: {}]
  %s5 = inlined_call_operand.hbm [shape: bf16[128,128], index: 5, kind: input, shape index: {}]
  %s6 = inlined_call_operand.vmem [shape: f32[1,128], index: 6, kind: input, shape index: {}]
  %s7 = inlined_call_operand.hbm [shape: bf16[128,256], index: 7, kind: input, shape index: {}]
  %s8 = inlined_call_operand.vmem [shape: f32[1,256], index: 8, kind: input, shape index: {}]
  %s9 = inlined_call_operand.hbm [shape: f32[48,256], index: 9, kind: output, shape index: {}]
  %s10 = sld [smem:[#allocation0]]
  $region93: #{tpu_custom_call.1} parent=0
    _
  %s12 = ssub.s32 1, %s10
  %s13 = scalar_select 0, %s12, %s10
  $region1: #{tpu_custom_call.1} parent=0
    #allocation2 [shape = 'u8[16384]{0}', space=vmem, size = 0x4000, scoped, tag = 'input window, operand 0']
    #allocation3 [shape = 's32[2]{0}', space=sflag, size = 0x8, scoped, tag = 'scoped memory for tpu_custom_call.1']
    #allocation4 [shape = 's32[2]{0}', space=sflag, size = 0x8, scoped, tag = 'scoped memory for tpu_custom_call.1']
    #allocation5 [shape = 'u8[65536]{0}', space=vmem, size = 0x10000, scoped, tag = 'input window, operand 1, single buffered']
    #allocation6 [shape = 's32[1]{0}', space=sflag, size = 0x4, scoped, tag = 'scoped memory for tpu_custom_call.1']
    #allocation7 [shape = 'u8[32768]{0}', space=vmem, size = 0x8000, scoped, tag = 'input window, operand 3, single buffered']
    #allocation8 [shape = 'u8[512]{0}', space=vmem, size = 0x400, scoped, tag = 'input window, operand 4, single buffered']
    #allocation9 [shape = 's32[1]{0}', space=sflag, size = 0x4, scoped, tag = 'scoped memory for tpu_custom_call.1']
    #allocation10 [shape = 'u8[32768]{0}', space=vmem, size = 0x8000, scoped, tag = 'input window, operand 5, single buffered']
    #allocation11 [shape = 'u8[65536]{0}', space=vmem, size = 0x10000, scoped, tag = 'input window, operand 7, single buffered']
    #allocation12 [shape = 's32[1]{0}', space=sflag, size = 0x4, scoped, tag = 'scoped memory for tpu_custom_call.1']
    #allocation13 [shape = 'u8[32768]{0}', space=vmem, size = 0x8000, scoped, tag = 'output window, operand 0']
    %14 = vsyncpa [#allocation3], 0
    %s15 = scalar_lea.sflag [#allocation3], 1
    %16 = vsyncpa %s15, 0
    %17 = vsyncpa [#allocation6], 0
    %18 = vsyncpa [#allocation9], 0
    %19 = vsyncpa [#allocation12], 0
    %20 = vsyncpa [#allocation4], 0
    %s21 = scalar_lea.sflag [#allocation4], 1
    %22 = vsyncpa %s21, 0
    loop: start=0, step=1, limit=5
    $region2: #{tpu_custom_call.1} parent=1 // loop_pre_header
      _
    $region3: #{tpu_custom_call.1} parent=1 // loop_header
      %s24 = sphi 0, %s28
      %p25 = scmp.ge.s32.totalorder %s24, 5
      %s34 = sphi 0, %s36
      %s37 = sphi 0, %s34
      %s38 = sphi 0, %s37
      %s54 = sphi 0, %s38
      %s58 = sphi 0, %s58
      %s60 = sphi 0, %s58
      %s61 = sphi 0, %s60
      %s75 = sphi 0, %s61
      %s79 = sphi 0, %s79
      %s81 = sphi 0, %s79
      %s82 = sphi 0, %s81
      %s96 = sphi 0, %s82
      %s100 = sphi 0, %s100
      %s102 = sphi 0, %s100
      %s103 = sphi 0, %s102
      %s117 = sphi 0, %s103
      %s121 = sphi 0, %s121
      %s123 = sphi 0, %s121
      %s124 = sphi 0, %s123
      %s138 = sphi 0, %s124
      %s142 = sphi 0, %s142
      %s144 = sphi 0, %s142
      %s145 = sphi 0, %s144
      %s159 = sphi 0, %s145
      %s163 = sphi 0, %s163
      %s165 = sphi 0, %s163
      %s166 = sphi 0, %s165
      %s180 = sphi 0, %s166
      %s184 = sphi 0, %s184
      %s186 = sphi 0, %s184
      %s187 = sphi 0, %s186
      %s201 = sphi 0, %s187
      %s205 = sphi 0, %s205
      %s207 = sphi 0, %s205
      %s208 = sphi 0, %s207
      %s222 = sphi 0, %s208
      %s228 = sphi 0, %s230
      %s231 = sphi 0, %s228
      %s232 = sphi 0, %s231
      %s248 = sphi 0, %s232
    $region4: #{tpu_custom_call.1} parent=1 // loop_header_branch
      %27 = sbr.rel (%p25) target = $region8
    $region5: #{tpu_custom_call.1} parent=1 // loop_body
      %s29 = ssub.s32 %s24, 1
      %s30 = ssub.s32 %s24, 2
      %s31 = sadd.s32 %s24, 1
      %s32 = ssub.s32 %s24, %s31
      %p33 = scmp.eq.s32.totalorder %s32, 0
      %s35 = sadd.s32 %s34, 1
      %s36 = scalar_select %p33, %s34, %s35
      %p39 = pneg %p33
      %p40 = scmp.eq.s32.totalorder %s24, 2
      %p41 = por %p39, %p40
      %p42 = scmp.ne.s32.totalorder %s34, %s37
      %p43 = scmp.eq.s32.totalorder %s24, 0
      %p44 = por %p42, %p43
      %p45 = scmp.ne.s32.totalorder %s34, %s37
      %p46 = scmp.eq.s32.totalorder %s29, 2
      %p47 = por %p45, %p46
      %p48 = scmp.ne.s32.totalorder %s37, %s38
      %p49 = scmp.eq.s32.totalorder %s29, 0
      %p50 = por %p48, %p49
      %p51 = scmp.ne.s32.totalorder %s37, %s38
      %p52 = scmp.eq.s32.totalorder %s30, 2
      %p53 = por %p51, %p52
      %p55 = scmp.ne.s32.totalorder %s38, %s54
      %p56 = scmp.eq.s32.totalorder %s30, 0
      %p57 = por %p55, %p56
      %s59 = sadd.s32 %s58, 1
      %p62 = scmp.eq.s32.totalorder %s24, 2
      %p63 = scmp.ne.s32.totalorder %s58, %s60
      %p64 = scmp.eq.s32.totalorder %s24, 0
      %p65 = por %p63, %p64
      %p66 = scmp.ne.s32.totalorder %s58, %s60
      %p67 = scmp.eq.s32.totalorder %s29, 2
      %p68 = por %p66, %p67
      %p69 = scmp.ne.s32.totalorder %s60, %s61
      %p70 = scmp.eq.s32.totalorder %s29, 0
      %p71 = por %p69, %p70
      %p72 = scmp.ne.s32.totalorder %s60, %s61
      %p73 = scmp.eq.s32.totalorder %s30, 2
      %p74 = por %p72, %p73
      %p76 = scmp.ne.s32.totalorder %s61, %s75
      %p77 = scmp.eq.s32.totalorder %s30, 0
      %p78 = por %p76, %p77
      %s80 = sadd.s32 %s79, 1
      %p83 = scmp.eq.s32.totalorder %s24, 2
      %p84 = scmp.ne.s32.totalorder %s79, %s81
      %p85 = scmp.eq.s32.totalorder %s24, 0
      %p86 = por %p84, %p85
      %p87 = scmp.ne.s32.totalorder %s79, %s81
      %p88 = scmp.eq.s32.totalorder %s29, 2
      %p89 = por %p87, %p88
      %p90 = scmp.ne.s32.totalorder %s81, %s82
      %p91 = scmp.eq.s32.totalorder %s29, 0
      %p92 = por %p90, %p91
      %p93 = scmp.ne.s32.totalorder %s81, %s82
      %p94 = scmp.eq.s32.totalorder %s30, 2
      %p95 = por %p93, %p94
      %p97 = scmp.ne.s32.totalorder %s82, %s96
      %p98 = scmp.eq.s32.totalorder %s30, 0
      %p99 = por %p97, %p98
      %s101 = sadd.s32 %s100, 1
      %p104 = scmp.eq.s32.totalorder %s24, 2
      %p105 = scmp.ne.s32.totalorder %s100, %s102
      %p106 = scmp.eq.s32.totalorder %s24, 0
      %p107 = por %p105, %p106
      %p108 = scmp.ne.s32.totalorder %s100, %s102
      %p109 = scmp.eq.s32.totalorder %s29, 2
      %p110 = por %p108, %p109
      %p111 = scmp.ne.s32.totalorder %s102, %s103
      %p112 = scmp.eq.s32.totalorder %s29, 0
      %p113 = por %p111, %p112
      %p114 = scmp.ne.s32.totalorder %s102, %s103
      %p115 = scmp.eq.s32.totalorder %s30, 2
      %p116 = por %p114, %p115
      %p118 = scmp.ne.s32.totalorder %s103, %s117
      %p119 = scmp.eq.s32.totalorder %s30, 0
      %p120 = por %p118, %p119
      %s122 = sadd.s32 %s121, 1
      %p125 = scmp.eq.s32.totalorder %s24, 2
      %p126 = scmp.ne.s32.totalorder %s121, %s123
      %p127 = scmp.eq.s32.totalorder %s24, 0
      %p128 = por %p126, %p127
      %p129 = scmp.ne.s32.totalorder %s121, %s123
      %p130 = scmp.eq.s32.totalorder %s29, 2
      %p131 = por %p129, %p130
      %p132 = scmp.ne.s32.totalorder %s123, %s124
      %p133 = scmp.eq.s32.totalorder %s29, 0
      %p134 = por %p132, %p133
      %p135 = scmp.ne.s32.totalorder %s123, %s124
      %p136 = scmp.eq.s32.totalorder %s30, 2
      %p137 = por %p135, %p136
      %p139 = scmp.ne.s32.totalorder %s124, %s138
      %p140 = scmp.eq.s32.totalorder %s30, 0
      %p141 = por %p139, %p140
      %s143 = sadd.s32 %s142, 1
      %p146 = scmp.eq.s32.totalorder %s24, 2
      %p147 = scmp.ne.s32.totalorder %s142, %s144
      %p148 = scmp.eq.s32.totalorder %s24, 0
      %p149 = por %p147, %p148
      %p150 = scmp.ne.s32.totalorder %s142, %s144
      %p151 = scmp.eq.s32.totalorder %s29, 2
      %p152 = por %p150, %p151
      %p153 = scmp.ne.s32.totalorder %s144, %s145
      %p154 = scmp.eq.s32.totalorder %s29, 0
      %p155 = por %p153, %p154
      %p156 = scmp.ne.s32.totalorder %s144, %s145
      %p157 = scmp.eq.s32.totalorder %s30, 2
      %p158 = por %p156, %p157
      %p160 = scmp.ne.s32.totalorder %s145, %s159
      %p161 = scmp.eq.s32.totalorder %s30, 0
      %p162 = por %p160, %p161
      %s164 = sadd.s32 %s163, 1
      %p167 = scmp.eq.s32.totalorder %s24, 2
      %p168 = scmp.ne.s32.totalorder %s163, %s165
      %p169 = scmp.eq.s32.totalorder %s24, 0
      %p170 = por %p168, %p169
      %p171 = scmp.ne.s32.totalorder %s163, %s165
      %p172 = scmp.eq.s32.totalorder %s29, 2
      %p173 = por %p171, %p172
      %p174 = scmp.ne.s32.totalorder %s165, %s166
      %p175 = scmp.eq.s32.totalorder %s29, 0
      %p176 = por %p174, %p175
      %p177 = scmp.ne.s32.totalorder %s165, %s166
      %p178 = scmp.eq.s32.totalorder %s30, 2
      %p179 = por %p177, %p178
      %p181 = scmp.ne.s32.totalorder %s166, %s180
      %p182 = scmp.eq.s32.totalorder %s30, 0
      %p183 = por %p181, %p182
      %s185 = sadd.s32 %s184, 1
      %p188 = scmp.eq.s32.totalorder %s24, 2
      %p189 = scmp.ne.s32.totalorder %s184, %s186
      %p190 = scmp.eq.s32.totalorder %s24, 0
      %p191 = por %p189, %p190
      %p192 = scmp.ne.s32.totalorder %s184, %s186
      %p193 = scmp.eq.s32.totalorder %s29, 2
      %p194 = por %p192, %p193
      %p195 = scmp.ne.s32.totalorder %s186, %s187
      %p196 = scmp.eq.s32.totalorder %s29, 0
      %p197 = por %p195, %p196
      %p198 = scmp.ne.s32.totalorder %s186, %s187
      %p199 = scmp.eq.s32.totalorder %s30, 2
      %p200 = por %p198, %p199
      %p202 = scmp.ne.s32.totalorder %s187, %s201
      %p203 = scmp.eq.s32.totalorder %s30, 0
      %p204 = por %p202, %p203
      %s206 = sadd.s32 %s205, 1
      %p209 = scmp.eq.s32.totalorder %s24, 2
      %p210 = scmp.ne.s32.totalorder %s205, %s207
      %p211 = scmp.eq.s32.totalorder %s24, 0
      %p212 = por %p210, %p211
      %p213 = scmp.ne.s32.totalorder %s205, %s207
      %p214 = scmp.eq.s32.totalorder %s29, 2
      %p215 = por %p213, %p214
      %p216 = scmp.ne.s32.totalorder %s207, %s208
      %p217 = scmp.eq.s32.totalorder %s29, 0
      %p218 = por %p216, %p217
      %p219 = scmp.ne.s32.totalorder %s207, %s208
      %p220 = scmp.eq.s32.totalorder %s30, 2
      %p221 = por %p219, %p220
      %p223 = scmp.ne.s32.totalorder %s208, %s222
      %p224 = scmp.eq.s32.totalorder %s30, 0
      %p225 = por %p223, %p224
      %s226 = ssub.s32 %s24, %s31
      %p227 = scmp.eq.s32.totalorder %s226, 0
      %s229 = sadd.s32 %s228, 1
      %s230 = scalar_select %p227, %s228, %s229
      %p233 = pneg %p227
      %p234 = scmp.eq.s32.totalorder %s24, 2
      %p235 = por %p233, %p234
      %p236 = scmp.ne.s32.totalorder %s228, %s231
      %p237 = scmp.eq.s32.totalorder %s24, 0
      %p238 = por %p236, %p237
      %p239 = scmp.ne.s32.totalorder %s228, %s231
      %p240 = scmp.eq.s32.totalorder %s29, 2
      %p241 = por %p239, %p240
      %p242 = scmp.ne.s32.totalorder %s231, %s232
      %p243 = scmp.eq.s32.totalorder %s29, 0
      %p244 = por %p242, %p243
      %p245 = scmp.ne.s32.totalorder %s231, %s232
      %p246 = scmp.eq.s32.totalorder %s30, 2
      %p247 = por %p245, %p246
      %p249 = scmp.ne.s32.totalorder %s232, %s248
      %p250 = scmp.eq.s32.totalorder %s30, 0
      %p251 = por %p249, %p250
      %p252 = scmp.le.s32.totalorder 1, %s24
      %p253 = scmp.lt.s32.totalorder %s24, 4
      %p254 = pnand %p252, %p253
      %p255 = pneg %p254
      // Predicated region
      $region9: #{tpu_custom_call.1} parent=5 // pred_check
        _
      $region10: #{tpu_custom_call.1} parent=5 // pred_check_branch
        %257 = sbr.rel (%p254) target = $region12
      $region11: #{tpu_custom_call.1} parent=5 // pred_region
        %s258 = ssub.s32 %s24, 1
        // Predicated region
        $region13: #{tpu_custom_call.1} parent=11 // pred_check
          %p259 = pneg %p71
        $region14: #{tpu_custom_call.1} parent=11 // pred_check_branch
          %261 = sbr.rel (%p259) target = $region16
        $region15: #{tpu_custom_call.1} parent=11 // pred_region
          %263 = vsyncadd [#allocation6], 0
          %s264 = sshll.u32 %s1, 4
          %s265 = int_to_ptr.hbm [resolvable:$true] %s264
          %s266 = sshll.u32 [#allocation5], 4
          %s267 = int_to_ptr.vmem [resolvable:$true] %s266
          %272 = dma.hbm_to_vmem [thread:$0]  %s265, 2048, %s267, [#allocation6], 64, 64, 4
        $region16: #{tpu_custom_call.1} parent=11 // pred_fallthru
          _
        // Predicated region
        $region17: #{tpu_custom_call.1} parent=11 // pred_check
          %p273 = pneg %p92
        $region18: #{tpu_custom_call.1} parent=11 // pred_check_branch
          %275 = sbr.rel (%p273) target = $region20
        $region19: #{tpu_custom_call.1} parent=11 // pred_region
          _
        $region20: #{tpu_custom_call.1} parent=11 // pred_fallthru
          _
        // Predicated region
        $region21: #{tpu_custom_call.1} parent=11 // pred_check
          %p276 = pneg %p113
        $region22: #{tpu_custom_call.1} parent=11 // pred_check_branch
          %278 = sbr.rel (%p276) target = $region24
        $region23: #{tpu_custom_call.1} parent=11 // pred_region
          %280 = vsyncadd [#allocation6], 0
          %s281 = sshll.u32 %s3, 4
          %s282 = int_to_ptr.hbm [resolvable:$true] %s281
          %s283 = sshll.u32 [#allocation7], 4
          %s284 = int_to_ptr.vmem [resolvable:$true] %s283
          %289 = dma.hbm_to_vmem [thread:$0]  %s282, 1024, %s284, [#allocation6], 64, 64, 4
        $region24: #{tpu_custom_call.1} parent=11 // pred_fallthru
          _
        // Predicated region
        $region25: #{tpu_custom_call.1} parent=11 // pred_check
          %p290 = pneg %p134
        $region26: #{tpu_custom_call.1} parent=11 // pred_check_branch
          %292 = sbr.rel (%p290) target = $region28
        $region27: #{tpu_custom_call.1} parent=11 // pred_region
          %294 = vsyncadd [#allocation9], 0
          %s296 = sshll.u32 %s4, 4
          %s297 = int_to_ptr.hbm [resolvable:$true] %s296
          %s298 = sshll.u32 [#allocation8], 4
          %s299 = int_to_ptr.vmem [resolvable:$true] %s298
          %301 = dma.hbm_to_vmem [thread:$0]  %s297, 16, %s299, [#allocation9]
        $region28: #{tpu_custom_call.1} parent=11 // pred_fallthru
          _
        // Predicated region
        $region29: #{tpu_custom_call.1} parent=11 // pred_check
          %p302 = pneg %p155
        $region30: #{tpu_custom_call.1} parent=11 // pred_check_branch
          %304 = sbr.rel (%p302) target = $region32
        $region31: #{tpu_custom_call.1} parent=11 // pred_region
          %306 = vsyncadd [#allocation9], 0
          %s307 = sshll.u32 %s5, 4
          %s308 = int_to_ptr.hbm [resolvable:$true] %s307
          %s309 = sshll.u32 [#allocation10], 4
          %s310 = int_to_ptr.vmem [resolvable:$true] %s309
          %315 = dma.hbm_to_vmem [thread:$0]  %s308, 1024, %s310, [#allocation9], 64, 64, 4
        $region32: #{tpu_custom_call.1} parent=11 // pred_fallthru
          _
        // Predicated region
        $region33: #{tpu_custom_call.1} parent=11 // pred_check
          %p316 = pneg %p176
        $region34: #{tpu_custom_call.1} parent=11 // pred_check_branch
          %318 = sbr.rel (%p316) target = $region36
        $region35: #{tpu_custom_call.1} parent=11 // pred_region
          _
        $region36: #{tpu_custom_call.1} parent=11 // pred_fallthru
          _
        // Predicated region
        $region37: #{tpu_custom_call.1} parent=11 // pred_check
          %p319 = pneg %p197
        $region38: #{tpu_custom_call.1} parent=11 // pred_check_branch
          %321 = sbr.rel (%p319) target = $region40
        $region39: #{tpu_custom_call.1} parent=11 // pred_region
          %323 = vsyncadd [#allocation12], 0
          %s324 = sshll.u32 %s7, 4
          %s325 = int_to_ptr.hbm [resolvable:$true] %s324
          %s326 = sshll.u32 [#allocation11], 4
          %s327 = int_to_ptr.vmem [resolvable:$true] %s326
          %332 = dma.hbm_to_vmem [thread:$0]  %s325, 2048, %s327, [#allocation12], 128, 128, 8
        $region40: #{tpu_custom_call.1} parent=11 // pred_fallthru
          _
        // Predicated region
        $region41: #{tpu_custom_call.1} parent=11 // pred_check
          %p333 = pneg %p218
        $region42: #{tpu_custom_call.1} parent=11 // pred_check_branch
          %335 = sbr.rel (%p333) target = $region44
        $region43: #{tpu_custom_call.1} parent=11 // pred_region
          _
        $region44: #{tpu_custom_call.1} parent=11 // pred_fallthru
          _
      $region12: #{tpu_custom_call.1} parent=5 // pred_fallthru
        _
      %p336 = scmp.lt.s32.totalorder %s24, 3
      // Predicated region
      $region45: #{tpu_custom_call.1} parent=5 // pred_check
        %p337 = pneg %p336
      $region46: #{tpu_custom_call.1} parent=5 // pred_check_branch
        %339 = sbr.rel (%p337) target = $region48
      $region47: #{tpu_custom_call.1} parent=5 // pred_region
        // Predicated region
        $region49: #{tpu_custom_call.1} parent=47 // pred_check
          %p340 = pneg %p44
        $region50: #{tpu_custom_call.1} parent=47 // pred_check_branch
          %342 = sbr.rel (%p340) target = $region52
        $region51: #{tpu_custom_call.1} parent=47 // pred_region
          %s343 = sand.u32 %s34, 1
          %s344 = scalar_lea.sflag [#allocation3], %s343
          %s345 = sand.u32 %s34, 1
          %s346 = smul.addr %s345, 16
          %s347 = scalar_lea.vmem [#allocation2], %s346
          %s348 = smul.u32 2, %s24
          %350 = vsyncadd %s344, 0
          %s351 = smul.addr %s348, 2
          %s352 = smul.addr %s351, 4
          %s353 = scalar_lea.hbm %s0, %s352
          %s354 = sshll.u32 %s353, 4
          %s355 = int_to_ptr.hbm [resolvable:$true] %s354
          %s356 = sshll.u32 %s347, 4
          %s357 = int_to_ptr.vmem [resolvable:$true] %s356
          %362 = dma.hbm_to_vmem [thread:$0]  %s355, 256, %s357, %s344, 128, 128, 8
        $region52: #{tpu_custom_call.1} parent=47 // pred_fallthru
          _
      $region48: #{tpu_custom_call.1} parent=5 // pred_fallthru
        _
      %p363 = scmp.le.s32.totalorder 1, %s24
      %p364 = scmp.lt.s32.totalorder %s24, 4
      %p365 = pnand %p363, %p364
      %p366 = pneg %p365
      // Predicated region
      $region53: #{tpu_custom_call.1} parent=5 // pred_check
        _
      $region54: #{tpu_custom_call.1} parent=5 // pred_check_branch
        %368 = sbr.rel (%p365) target = $region56
      $region55: #{tpu_custom_call.1} parent=5 // pred_region
        %s369 = ssub.s32 %s24, 1
        %s370 = sand.u32 %s37, 1
        %s371 = scalar_lea.sflag [#allocation3], %s370
        %s372 = sand.u32 %s37, 1
        %s373 = smul.addr %s372, 16
        %s374 = scalar_lea.vmem [#allocation2], %s373
        // Predicated region
        $region57: #{tpu_custom_call.1} parent=55 // pred_check
          %p375 = pneg %p50
        $region58: #{tpu_custom_call.1} parent=55 // pred_check_branch
          %377 = sbr.rel (%p375) target = $region60
        $region59: #{tpu_custom_call.1} parent=55 // pred_region
          %379 = dma.done %s371, 256
        $region60: #{tpu_custom_call.1} parent=55 // pred_fallthru
          _
        // Predicated region
        $region61: #{tpu_custom_call.1} parent=55 // pred_check
          %p380 = pneg %p71
        $region62: #{tpu_custom_call.1} parent=55 // pred_check_branch
          %382 = sbr.rel (%p380) target = $region64
        $region63: #{tpu_custom_call.1} parent=55 // pred_region
          %384 = dma.done [#allocation6], 2048
        $region64: #{tpu_custom_call.1} parent=55 // pred_fallthru
          _
        // Predicated region
        $region65: #{tpu_custom_call.1} parent=55 // pred_check
          %p385 = pneg %p113
        $region66: #{tpu_custom_call.1} parent=55 // pred_check_branch
          %387 = sbr.rel (%p385) target = $region68
        $region67: #{tpu_custom_call.1} parent=55 // pred_region
          %389 = dma.done [#allocation6], 1024
        $region68: #{tpu_custom_call.1} parent=55 // pred_fallthru
          _
        // Predicated region
        $region69: #{tpu_custom_call.1} parent=55 // pred_check
          %p390 = pneg %p134
        $region70: #{tpu_custom_call.1} parent=55 // pred_check_branch
          %392 = sbr.rel (%p390) target = $region72
        $region71: #{tpu_custom_call.1} parent=55 // pred_region
          %394 = dma.done [#allocation9], 16
        $region72: #{tpu_custom_call.1} parent=55 // pred_fallthru
          _
        // Predicated region
        $region73: #{tpu_custom_call.1} parent=55 // pred_check
          %p395 = pneg %p155
        $region74: #{tpu_custom_call.1} parent=55 // pred_check_branch
          %397 = sbr.rel (%p395) target = $region76
        $region75: #{tpu_custom_call.1} parent=55 // pred_region
          %399 = dma.done [#allocation9], 1024
        $region76: #{tpu_custom_call.1} parent=55 // pred_fallthru
          _
        // Predicated region
        $region77: #{tpu_custom_call.1} parent=55 // pred_check
          %p400 = pneg %p197
        $region78: #{tpu_custom_call.1} parent=55 // pred_check_branch
          %402 = sbr.rel (%p400) target = $region80
        $region79: #{tpu_custom_call.1} parent=55 // pred_region
          %404 = dma.done [#allocation12], 2048
        $region80: #{tpu_custom_call.1} parent=55 // pred_fallthru
          _
        %s405 = sand.u32 %s37, 1
        %s406 = scalar_lea.sflag [#allocation3], %s405
        %s407 = sand.u32 %s37, 1
        %s408 = smul.addr %s407, 16
        %s409 = scalar_lea.vmem [#allocation2], %s408
        %p410 = pneg %p50
        %p411 = pneg %p47
        %p412 = pneg %p71
        %p413 = pneg %p68
        %p414 = pneg %p92
        %p415 = pneg %p89
        %p416 = pneg %p113
        %p417 = pneg %p110
        %p418 = pneg %p134
        %p419 = pneg %p131
        %p420 = pneg %p155
        %p421 = pneg %p152
        %p422 = pneg %p176
        %p423 = pneg %p173
        %p424 = pneg %p197
        %p425 = pneg %p194
        %p426 = pneg %p218
        %p427 = pneg %p215
        %p428 = pneg %p244
        %p429 = pneg %p241
        %s430 = sand.u32 %s231, 1
        %s431 = scalar_lea.sflag [#allocation4], %s430
        %s432 = sand.u32 %s231, 1
        %s433 = smul.addr %s432, 32
        %s434 = scalar_lea.vmem [#allocation13], %s433
        %s435 = smul.u32 2, %s29
        %s436 = smul.u32 2, %s29
        %v437 = vld [vmem:[%s374] sm:$0xff]
        %v438 = vld [vmem:[%s374 + $0x8] sm:$0xff]
        %v439 = vld [vmem:[#allocation5] sm:$0xf]
        %v440 = vld [vmem:[#allocation5 + $0x4] sm:$0xf]
        %v441 = vld [vmem:[#allocation5 + $0x8] sm:$0xf]
        %v442 = vld [vmem:[#allocation5 + $0xc] sm:$0xf]
        %v443 = vld [vmem:[#allocation5 + $0x10] sm:$0xf]
        %v444 = vld [vmem:[#allocation5 + $0x14] sm:$0xf]
        %v445 = vld [vmem:[#allocation5 + $0x18] sm:$0xf]
        %v446 = vld [vmem:[#allocation5 + $0x1c] sm:$0xf]
        %v447 = vld [vmem:[#allocation5 + $0x20] sm:$0xf]
        %v448 = vld [vmem:[#allocation5 + $0x24] sm:$0xf]
        %v449 = vld [vmem:[#allocation5 + $0x28] sm:$0xf]
        %v450 = vld [vmem:[#allocation5 + $0x2c] sm:$0xf]
        %v451 = vld [vmem:[#allocation5 + $0x30] sm:$0xf]
        %v452 = vld [vmem:[#allocation5 + $0x34] sm:$0xf]
        %v453 = vld [vmem:[#allocation5 + $0x38] sm:$0xf]
        %v454 = vld [vmem:[#allocation5 + $0x3c] sm:$0xf]
        %v455 = vld [vmem:[#allocation5 + $0x40] sm:$0xf]
        %v456 = vld [vmem:[#allocation5 + $0x44] sm:$0xf]
        %v457 = vld [vmem:[#allocation5 + $0x48] sm:$0xf]
        %v458 = vld [vmem:[#allocation5 + $0x4c] sm:$0xf]
        %v459 = vld [vmem:[#allocation5 + $0x50] sm:$0xf]
        %v460 = vld [vmem:[#allocation5 + $0x54] sm:$0xf]
        %v461 = vld [vmem:[#allocation5 + $0x58] sm:$0xf]
        %v462 = vld [vmem:[#allocation5 + $0x5c] sm:$0xf]
        %v463 = vld [vmem:[#allocation5 + $0x60] sm:$0xf]
        %v464 = vld [vmem:[#allocation5 + $0x64] sm:$0xf]
        %v465 = vld [vmem:[#allocation5 + $0x68] sm:$0xf]
        %v466 = vld [vmem:[#allocation5 + $0x6c] sm:$0xf]
        %v467 = vld [vmem:[#allocation5 + $0x70] sm:$0xf]
        %v468 = vld [vmem:[#allocation5 + $0x74] sm:$0xf]
        %v469 = vld [vmem:[#allocation5 + $0x78] sm:$0xf]
        %v470 = vld [vmem:[#allocation5 + $0x7c] sm:$0xf]
        %v471 = vld [vmem:[%s2] sm:$0x1]
        %v473 = vperm.slane %v471, 0
        %v477 = vunpack.c.l.b16 %v437
        %v478 = vunpack.c.h.b16 %v437
        %v479 = vunpack.c.l.b16 %v438
        %v480 = vunpack.c.h.b16 %v438
        %v481 = vpack.c.b16 %v479, %v477
        %v482 = vpack.c.b16 %v480, %v478
        %v517 = vunpack.c.l.b16 %v439
        %v518 = vunpack.c.l.b16 %v440
        %v519 = vunpack.c.l.b16 %v441
        %v520 = vunpack.c.l.b16 %v442
        %v521 = vunpack.c.l.b16 %v443
        %v522 = vunpack.c.l.b16 %v444
        %v523 = vunpack.c.l.b16 %v445
        %v524 = vunpack.c.l.b16 %v446
        %v525 = vunpack.c.l.b16 %v447
        %v526 = vunpack.c.l.b16 %v448
        %v527 = vunpack.c.l.b16 %v449
        %v528 = vunpack.c.l.b16 %v450
        %v529 = vunpack.c.l.b16 %v451
        %v530 = vunpack.c.l.b16 %v452
        %v531 = vunpack.c.l.b16 %v453
        %v532 = vunpack.c.l.b16 %v454
        %v533 = vunpack.c.l.b16 %v455
        %v534 = vunpack.c.l.b16 %v456
        %v535 = vunpack.c.l.b16 %v457
        %v536 = vunpack.c.l.b16 %v458
        %v537 = vunpack.c.l.b16 %v459
        %v538 = vunpack.c.l.b16 %v460
        %v539 = vunpack.c.l.b16 %v461
        %v540 = vunpack.c.l.b16 %v462
        %v541 = vunpack.c.l.b16 %v463
        %v542 = vunpack.c.l.b16 %v464
        %v543 = vunpack.c.l.b16 %v465
        %v544 = vunpack.c.l.b16 %v466
        %v545 = vunpack.c.l.b16 %v467
        %v546 = vunpack.c.l.b16 %v468
        %v547 = vunpack.c.l.b16 %v469
        %v548 = vunpack.c.l.b16 %v470
        %v549 = vpack.c.b16 %v518, %v517
        %v550 = vpack.c.b16 %v520, %v519
        %v551 = vpack.c.b16 %v522, %v521
        %v552 = vpack.c.b16 %v524, %v523
        %v553 = vpack.c.b16 %v526, %v525
        %v554 = vpack.c.b16 %v528, %v527
        %v555 = vpack.c.b16 %v530, %v529
        %v556 = vpack.c.b16 %v532, %v531
        %v557 = vpack.c.b16 %v534, %v533
        %v558 = vpack.c.b16 %v536, %v535
        %v559 = vpack.c.b16 %v538, %v537
        %v560 = vpack.c.b16 %v540, %v539
        %v561 = vpack.c.b16 %v542, %v541
        %v562 = vpack.c.b16 %v544, %v543
        %v563 = vpack.c.b16 %v546, %v545
        %v564 = vpack.c.b16 %v548, %v547
        %581 = vmatpush.bf16.msra.mxu0 %v556
        %582 = vmatpush.bf16.msra.mxu0 %v555
        %583 = vmatpush.bf16.msra.mxu0 %v554
        %584 = vmatpush.bf16.msra.mxu0 %v553
        %585 = vmatpush.bf16.msra.mxu0 %v552
        %586 = vmatpush.bf16.msra.mxu0 %v551
        %587 = vmatpush.bf16.msra.mxu0 %v550
        %588 = vmatpush.bf16.msra.mxu0 %v549
        %589 = vmatmul.bf16.gmra.mxu0 %v481
        %v590 = vpop.f32.mrf.mxu0
        %v591 = vadd.f32 %v473, %v590
        %v592 = vpop.f32.mrf.mxu0
        %v593 = vadd.f32 %v473, %v592
        %594 = vdwg.mxu0
        %595 = vmatpush.bf16.msra.mxu0 %v564
        %596 = vmatpush.bf16.msra.mxu0 %v563
        %597 = vmatpush.bf16.msra.mxu0 %v562
        %598 = vmatpush.bf16.msra.mxu0 %v561
        %599 = vmatpush.bf16.msra.mxu0 %v560
        %600 = vmatpush.bf16.msra.mxu0 %v559
        %601 = vmatpush.bf16.msra.mxu0 %v558
        %602 = vmatpush.bf16.msra.mxu0 %v557
        %603 = vmatmul.bf16.gmra.mxu0 %v482
        %v604 = vpop.f32.mrf.mxu0
        %v605 = vadd.f32 %v591, %v604
        %v606 = vpop.f32.mrf.mxu0
        %v607 = vadd.f32 %v593, %v606
        %608 = vdwg.mxu0
        %v609 = vxor.u32 %v605, 2147483648
        %v610 = vxor.u32 %v607, 2147483648
        %v611 = vmul.f32 %v609, 1.442695
        %v612 = vpow.pop %v611
        %v613 = vmul.f32 %v610, 1.442695
        %v614 = vpow.pop %v613
        %v615 = vadd.f32 %v612, 1.0
        %v616 = vadd.f32 %v614, 1.0
        %v617 = vrcp.pop %v615
        %v618 = vmul.f32 %v615, %v617
        %v619 = vsub.f32 1.0, %v618
        %v620 = vmul.f32 %v617, %v619
        %v621 = vadd.f32 %v617, %v620
        %vm622 = vweird.f32 %v615
        %vm623 = vweird.f32 %v617
        %vm624 = vmor %vm622, %vm623
        %v625 = vsel %vm624, %v617, %v621
        %v626 = vand.u32 2147483647, %v615
        %vm627 = vcmp.eq.f32.partialorder %v626, 8.507059e+37
        %v628 = vand.u32 %v615, 2147483648
        %v629 = vor.u32 1.1754944e-38, %v628
        %v630 = vsel %vm627, %v629, %v625
        %v631 = vmul.f32 1.0, %v630
        %v632 = vrcp.pop %v616
        %v633 = vmul.f32 %v616, %v632
        %v634 = vsub.f32 1.0, %v633
        %v635 = vmul.f32 %v632, %v634
        %v636 = vadd.f32 %v632, %v635
        %vm637 = vweird.f32 %v616
        %vm638 = vweird.f32 %v632
        %vm639 = vmor %vm637, %vm638
        %v640 = vsel %vm639, %v632, %v636
        %v641 = vand.u32 2147483647, %v616
        %vm642 = vcmp.eq.f32.partialorder %v641, 8.507059e+37
        %v643 = vand.u32 %v616, 2147483648
        %v644 = vor.u32 1.1754944e-38, %v643
        %v645 = vsel %vm642, %v644, %v640
        %v646 = vmul.f32 1.0, %v645
        %v647 = vpack.c.bf16 %v646, %v631
        %v648 = vld [vmem:[#allocation7] sm:$0xf]
        %v649 = vld [vmem:[#allocation7 + $0x4] sm:$0xf]
        %v650 = vld [vmem:[#allocation7 + $0x8] sm:$0xf]
        %v651 = vld [vmem:[#allocation7 + $0xc] sm:$0xf]
        %v652 = vld [vmem:[#allocation7 + $0x10] sm:$0xf]
        %v653 = vld [vmem:[#allocation7 + $0x14] sm:$0xf]
        %v654 = vld [vmem:[#allocation7 + $0x18] sm:$0xf]
        %v655 = vld [vmem:[#allocation7 + $0x1c] sm:$0xf]
        %v656 = vld [vmem:[#allocation7 + $0x20] sm:$0xf]
        %v657 = vld [vmem:[#allocation7 + $0x24] sm:$0xf]
        %v658 = vld [vmem:[#allocation7 + $0x28] sm:$0xf]
        %v659 = vld [vmem:[#allocation7 + $0x2c] sm:$0xf]
        %v660 = vld [vmem:[#allocation7 + $0x30] sm:$0xf]
        %v661 = vld [vmem:[#allocation7 + $0x34] sm:$0xf]
        %v662 = vld [vmem:[#allocation7 + $0x38] sm:$0xf]
        %v663 = vld [vmem:[#allocation7 + $0x3c] sm:$0xf]
        %v664 = vld [vmem:[#allocation8] sm:$0x1]
        %v666 = vperm.slane %v664, 0
        %v684 = vunpack.c.l.b16 %v648
        %v685 = vunpack.c.l.b16 %v649
        %v686 = vunpack.c.l.b16 %v650
        %v687 = vunpack.c.l.b16 %v651
        %v688 = vunpack.c.l.b16 %v652
        %v689 = vunpack.c.l.b16 %v653
        %v690 = vunpack.c.l.b16 %v654
        %v691 = vunpack.c.l.b16 %v655
        %v692 = vunpack.c.l.b16 %v656
        %v693 = vunpack.c.l.b16 %v657
        %v694 = vunpack.c.l.b16 %v658
        %v695 = vunpack.c.l.b16 %v659
        %v696 = vunpack.c.l.b16 %v660
        %v697 = vunpack.c.l.b16 %v661
        %v698 = vunpack.c.l.b16 %v662
        %v699 = vunpack.c.l.b16 %v663
        %v700 = vpack.c.b16 %v685, %v684
        %v701 = vpack.c.b16 %v687, %v686
        %v702 = vpack.c.b16 %v689, %v688
        %v703 = vpack.c.b16 %v691, %v690
        %v704 = vpack.c.b16 %v693, %v692
        %v705 = vpack.c.b16 %v695, %v694
        %v706 = vpack.c.b16 %v697, %v696
        %v707 = vpack.c.b16 %v699, %v698
        %716 = vmatpush.bf16.msra.mxu0 %v707
        %717 = vmatpush.bf16.msra.mxu0 %v706
        %718 = vmatpush.bf16.msra.mxu0 %v705
        %719 = vmatpush.bf16.msra.mxu0 %v704
        %720 = vmatpush.bf16.msra.mxu0 %v703
        %721 = vmatpush.bf16.msra.mxu0 %v702
        %722 = vmatpush.bf16.msra.mxu0 %v701
        %723 = vmatpush.bf16.msra.mxu0 %v700
        %724 = vmatmul.bf16.gmra.mxu0 %v647
        %v725 = vpop.f32.mrf.mxu0
        %v726 = vadd.f32 %v666, %v725
        %v727 = vpop.f32.mrf.mxu0
        %v728 = vadd.f32 %v666, %v727
        %729 = vdwg.mxu0
        %v730 = vxor.u32 %v726, 2147483648
        %v731 = vxor.u32 %v728, 2147483648
        %v732 = vmul.f32 %v730, 1.442695
        %v733 = vpow.pop %v732
        %v734 = vmul.f32 %v731, 1.442695
        %v735 = vpow.pop %v734
        %v736 = vadd.f32 %v733, 1.0
        %v737 = vadd.f32 %v735, 1.0
        %v738 = vrcp.pop %v736
        %v739 = vmul.f32 %v736, %v738
        %v740 = vsub.f32 1.0, %v739
        %v741 = vmul.f32 %v738, %v740
        %v742 = vadd.f32 %v738, %v741
        %vm743 = vweird.f32 %v736
        %vm744 = vweird.f32 %v738
        %vm745 = vmor %vm743, %vm744
        %v746 = vsel %vm745, %v738, %v742
        %v747 = vand.u32 2147483647, %v736
        %vm748 = vcmp.eq.f32.partialorder %v747, 8.507059e+37
        %v749 = vand.u32 %v736, 2147483648
        %v750 = vor.u32 1.1754944e-38, %v749
        %v751 = vsel %vm748, %v750, %v746
        %v752 = vmul.f32 1.0, %v751
        %v753 = vrcp.pop %v737
        %v754 = vmul.f32 %v737, %v753
        %v755 = vsub.f32 1.0, %v754
        %v756 = vmul.f32 %v753, %v755
        %v757 = vadd.f32 %v753, %v756
        %vm758 = vweird.f32 %v737
        %vm759 = vweird.f32 %v753
        %vm760 = vmor %vm758, %vm759
        %v761 = vsel %vm760, %v753, %v757
        %v762 = vand.u32 2147483647, %v737
        %vm763 = vcmp.eq.f32.partialorder %v762, 8.507059e+37
        %v764 = vand.u32 %v737, 2147483648
        %v765 = vor.u32 1.1754944e-38, %v764
        %v766 = vsel %vm763, %v765, %v761
        %v767 = vmul.f32 1.0, %v766
        %v768 = vpack.c.bf16 %v767, %v752
        %v769 = vld [vmem:[#allocation10] sm:$0xf]
        %v770 = vld [vmem:[#allocation10 + $0x4] sm:$0xf]
        %v771 = vld [vmem:[#allocation10 + $0x8] sm:$0xf]
        %v772 = vld [vmem:[#allocation10 + $0xc] sm:$0xf]
        %v773 = vld [vmem:[#allocation10 + $0x10] sm:$0xf]
        %v774 = vld [vmem:[#allocation10 + $0x14] sm:$0xf]
        %v775 = vld [vmem:[#allocation10 + $0x18] sm:$0xf]
        %v776 = vld [vmem:[#allocation10 + $0x1c] sm:$0xf]
        %v777 = vld [vmem:[#allocation10 + $0x20] sm:$0xf]
        %v778 = vld [vmem:[#allocation10 + $0x24] sm:$0xf]
        %v779 = vld [vmem:[#allocation10 + $0x28] sm:$0xf]
        %v780 = vld [vmem:[#allocation10 + $0x2c] sm:$0xf]
        %v781 = vld [vmem:[#allocation10 + $0x30] sm:$0xf]
        %v782 = vld [vmem:[#allocation10 + $0x34] sm:$0xf]
        %v783 = vld [vmem:[#allocation10 + $0x38] sm:$0xf]
        %v784 = vld [vmem:[#allocation10 + $0x3c] sm:$0xf]
        %v785 = vld [vmem:[%s6] sm:$0x1]
        %v787 = vperm.slane %v785, 0
        %v805 = vunpack.c.l.b16 %v769
        %v806 = vunpack.c.l.b16 %v770
        %v807 = vunpack.c.l.b16 %v771
        %v808 = vunpack.c.l.b16 %v772
        %v809 = vunpack.c.l.b16 %v773
        %v810 = vunpack.c.l.b16 %v774
        %v811 = vunpack.c.l.b16 %v775
        %v812 = vunpack.c.l.b16 %v776
        %v813 = vunpack.c.l.b16 %v777
        %v814 = vunpack.c.l.b16 %v778
        %v815 = vunpack.c.l.b16 %v779
        %v816 = vunpack.c.l.b16 %v780
        %v817 = vunpack.c.l.b16 %v781
        %v818 = vunpack.c.l.b16 %v782
        %v819 = vunpack.c.l.b16 %v783
        %v820 = vunpack.c.l.b16 %v784
        %v821 = vpack.c.b16 %v806, %v805
        %v822 = vpack.c.b16 %v808, %v807
        %v823 = vpack.c.b16 %v810, %v809
        %v824 = vpack.c.b16 %v812, %v811
        %v825 = vpack.c.b16 %v814, %v813
        %v826 = vpack.c.b16 %v816, %v815
        %v827 = vpack.c.b16 %v818, %v817
        %v828 = vpack.c.b16 %v820, %v819
        %837 = vmatpush.bf16.msra.mxu0 %v828
        %838 = vmatpush.bf16.msra.mxu0 %v827
        %839 = vmatpush.bf16.msra.mxu0 %v826
        %840 = vmatpush.bf16.msra.mxu0 %v825
        %841 = vmatpush.bf16.msra.mxu0 %v824
        %842 = vmatpush.bf16.msra.mxu0 %v823
        %843 = vmatpush.bf16.msra.mxu0 %v822
        %844 = vmatpush.bf16.msra.mxu0 %v821
        %845 = vmatmul.bf16.gmra.mxu0 %v768
        %v846 = vpop.f32.mrf.mxu0
        %v847 = vadd.f32 %v787, %v846
        %v848 = vpop.f32.mrf.mxu0
        %v849 = vadd.f32 %v787, %v848
        %850 = vdwg.mxu0
        %v851 = vxor.u32 %v847, 2147483648
        %v852 = vxor.u32 %v849, 2147483648
        %v853 = vmul.f32 %v851, 1.442695
        %v854 = vpow.pop %v853
        %v855 = vmul.f32 %v852, 1.442695
        %v856 = vpow.pop %v855
        %v857 = vadd.f32 %v854, 1.0
        %v858 = vadd.f32 %v856, 1.0
        %v859 = vrcp.pop %v857
        %v860 = vmul.f32 %v857, %v859
        %v861 = vsub.f32 1.0, %v860
        %v862 = vmul.f32 %v859, %v861
        %v863 = vadd.f32 %v859, %v862
        %vm864 = vweird.f32 %v857
        %vm865 = vweird.f32 %v859
        %vm866 = vmor %vm864, %vm865
        %v867 = vsel %vm866, %v859, %v863
        %v868 = vand.u32 2147483647, %v857
        %vm869 = vcmp.eq.f32.partialorder %v868, 8.507059e+37
        %v870 = vand.u32 %v857, 2147483648
        %v871 = vor.u32 1.1754944e-38, %v870
        %v872 = vsel %vm869, %v871, %v867
        %v873 = vmul.f32 1.0, %v872
        %v874 = vrcp.pop %v858
        %v875 = vmul.f32 %v858, %v874
        %v876 = vsub.f32 1.0, %v875
        %v877 = vmul.f32 %v874, %v876
        %v878 = vadd.f32 %v874, %v877
        %vm879 = vweird.f32 %v858
        %vm880 = vweird.f32 %v874
        %vm881 = vmor %vm879, %vm880
        %v882 = vsel %vm881, %v874, %v878
        %v883 = vand.u32 2147483647, %v858
        %vm884 = vcmp.eq.f32.partialorder %v883, 8.507059e+37
        %v885 = vand.u32 %v858, 2147483648
        %v886 = vor.u32 1.1754944e-38, %v885
        %v887 = vsel %vm884, %v886, %v882
        %v888 = vmul.f32 1.0, %v887
        %v889 = vpack.c.bf16 %v888, %v873
        %v890 = vld [vmem:[#allocation11] sm:$0xff]
        %v891 = vld [vmem:[#allocation11 + $0x8] sm:$0xff]
        %v892 = vld [vmem:[#allocation11 + $0x10] sm:$0xff]
        %v893 = vld [vmem:[#allocation11 + $0x18] sm:$0xff]
        %v894 = vld [vmem:[#allocation11 + $0x20] sm:$0xff]
        %v895 = vld [vmem:[#allocation11 + $0x28] sm:$0xff]
        %v896 = vld [vmem:[#allocation11 + $0x30] sm:$0xff]
        %v897 = vld [vmem:[#allocation11 + $0x38] sm:$0xff]
        %v898 = vld [vmem:[#allocation11 + $0x40] sm:$0xff]
        %v899 = vld [vmem:[#allocation11 + $0x48] sm:$0xff]
        %v900 = vld [vmem:[#allocation11 + $0x50] sm:$0xff]
        %v901 = vld [vmem:[#allocation11 + $0x58] sm:$0xff]
        %v902 = vld [vmem:[#allocation11 + $0x60] sm:$0xff]
        %v903 = vld [vmem:[#allocation11 + $0x68] sm:$0xff]
        %v904 = vld [vmem:[#allocation11 + $0x70] sm:$0xff]
        %v905 = vld [vmem:[#allocation11 + $0x78] sm:$0xff]
        %v906 = vld [vmem:[%s8] sm:$0x3]
        %v908 = vperm.slane %v906, 0
        %v909 = vperm.slane %v906, 1
        %v928 = vunpack.c.l.b16 %v890
        %v929 = vunpack.c.h.b16 %v890
        %v930 = vunpack.c.l.b16 %v891
        %v931 = vunpack.c.h.b16 %v891
        %v932 = vunpack.c.l.b16 %v892
        %v933 = vunpack.c.h.b16 %v892
        %v934 = vunpack.c.l.b16 %v893
        %v935 = vunpack.c.h.b16 %v893
        %v936 = vunpack.c.l.b16 %v894
        %v937 = vunpack.c.h.b16 %v894
        %v938 = vunpack.c.l.b16 %v895
        %v939 = vunpack.c.h.b16 %v895
        %v940 = vunpack.c.l.b16 %v896
        %v941 = vunpack.c.h.b16 %v896
        %v942 = vunpack.c.l.b16 %v897
        %v943 = vunpack.c.h.b16 %v897
        %v944 = vunpack.c.l.b16 %v898
        %v945 = vunpack.c.h.b16 %v898
        %v946 = vunpack.c.l.b16 %v899
        %v947 = vunpack.c.h.b16 %v899
        %v948 = vunpack.c.l.b16 %v900
        %v949 = vunpack.c.h.b16 %v900
        %v950 = vunpack.c.l.b16 %v901
        %v951 = vunpack.c.h.b16 %v901
        %v952 = vunpack.c.l.b16 %v902
        %v953 = vunpack.c.h.b16 %v902
        %v954 = vunpack.c.l.b16 %v903
        %v955 = vunpack.c.h.b16 %v903
        %v956 = vunpack.c.l.b16 %v904
        %v957 = vunpack.c.h.b16 %v904
        %v958 = vunpack.c.l.b16 %v905
        %v959 = vunpack.c.h.b16 %v905
        %v960 = vpack.c.b16 %v930, %v928
        %v961 = vpack.c.b16 %v931, %v929
        %v962 = vpack.c.b16 %v934, %v932
        %v963 = vpack.c.b16 %v935, %v933
        %v964 = vpack.c.b16 %v938, %v936
        %v965 = vpack.c.b16 %v939, %v937
        %v966 = vpack.c.b16 %v942, %v940
        %v967 = vpack.c.b16 %v943, %v941
        %v968 = vpack.c.b16 %v946, %v944
        %v969 = vpack.c.b16 %v947, %v945
        %v970 = vpack.c.b16 %v950, %v948
        %v971 = vpack.c.b16 %v951, %v949
        %v972 = vpack.c.b16 %v954, %v952
        %v973 = vpack.c.b16 %v955, %v953
        %v974 = vpack.c.b16 %v958, %v956
        %v975 = vpack.c.b16 %v959, %v957
        %992 = vmatpush.bf16.msra.mxu0 %v974
        %993 = vmatpush.bf16.msra.mxu0 %v972
        %994 = vmatpush.bf16.msra.mxu0 %v970
        %995 = vmatpush.bf16.msra.mxu0 %v968
        %996 = vmatpush.bf16.msra.mxu0 %v966
        %997 = vmatpush.bf16.msra.mxu0 %v964
        %998 = vmatpush.bf16.msra.mxu0 %v962
        %999 = vmatpush.bf16.msra.mxu0 %v960
        %1000 = vmatmul.bf16.gmra.mxu0 %v889
        %v1001 = vpop.f32.mrf.mxu0
        %v1002 = vadd.f32 %v908, %v1001
        %v1003 = vpop.f32.mrf.mxu0
        %v1004 = vadd.f32 %v908, %v1003
        %1005 = vdwg.mxu0
        %1006 = vmatpush.bf16.msra.mxu0 %v975
        %1007 = vmatpush.bf16.msra.mxu0 %v973
        %1008 = vmatpush.bf16.msra.mxu0 %v971
        %1009 = vmatpush.bf16.msra.mxu0 %v969
        %1010 = vmatpush.bf16.msra.mxu0 %v967
        %1011 = vmatpush.bf16.msra.mxu0 %v965
        %1012 = vmatpush.bf16.msra.mxu0 %v963
        %1013 = vmatpush.bf16.msra.mxu0 %v961
        %1014 = vmatmul.bf16.gmra.mxu0 %v889
        %v1015 = vpop.f32.mrf.mxu0
        %v1016 = vadd.f32 %v909, %v1015
        %v1017 = vpop.f32.mrf.mxu0
        %v1018 = vadd.f32 %v909, %v1017
        %1019 = vdwg.mxu0
        %1020 = vst [vmem:[%s434] sm:$0xff] %v1002
        %1021 = vst [vmem:[%s434 + $0x8] sm:$0xff] %v1016
        %1022 = vst [vmem:[%s434 + $0x10] sm:$0xff] %v1004
        %1023 = vst [vmem:[%s434 + $0x18] sm:$0xff] %v1018
        %s1024 = sand.u32 %s231, 1
        %s1025 = scalar_lea.sflag [#allocation4], %s1024
        %s1026 = sand.u32 %s231, 1
        %s1027 = smul.addr %s1026, 32
        %s1028 = scalar_lea.vmem [#allocation13], %s1027
        // Predicated region
        $region81: #{tpu_custom_call.1} parent=55 // pred_check
          %p1029 = pneg %p241
        $region82: #{tpu_custom_call.1} parent=55 // pred_check_branch
          %1031 = sbr.rel (%p1029) target = $region84
        $region83: #{tpu_custom_call.1} parent=55 // pred_region
          %s1032 = smul.u32 2, %s29
          %1034 = vsyncadd %s1025, 0
          %s1035 = smul.addr %s1032, 2
          %s1036 = smul.addr %s1035, 8
          %s1037 = scalar_lea.hbm %s9, %s1036
          %s1038 = sshll.u32 %s1028, 4
          %s1039 = int_to_ptr.vmem [resolvable:$true] %s1038
          %s1040 = sshll.u32 %s1037, 4
          %s1041 = int_to_ptr.hbm [resolvable:$true] %s1040
          %1046 = dma.vmem_to_hbm [thread:$0]  %s1039, 512, %s1041, %s1025, 256, 256, 16
        $region84: #{tpu_custom_call.1} parent=55 // pred_fallthru
          _
      $region56: #{tpu_custom_call.1} parent=5 // pred_fallthru
        _
      %p1047 = scmp.le.s32.totalorder 2, %s24
      // Predicated region
      $region85: #{tpu_custom_call.1} parent=5 // pred_check
        %p1048 = pneg %p1047
      $region86: #{tpu_custom_call.1} parent=5 // pred_check_branch
        %1050 = sbr.rel (%p1048) target = $region88
      $region87: #{tpu_custom_call.1} parent=5 // pred_region
        %s1051 = ssub.s32 %s24, 2
        // Predicated region
        $region89: #{tpu_custom_call.1} parent=87 // pred_check
          %p1052 = pneg %p247
        $region90: #{tpu_custom_call.1} parent=87 // pred_check_branch
          %1054 = sbr.rel (%p1052) target = $region92
        $region91: #{tpu_custom_call.1} parent=87 // pred_region
          %s1055 = sand.u32 %s232, 1
          %s1056 = scalar_lea.sflag [#allocation4], %s1055
          %s1057 = sand.u32 %s232, 1
          %s1058 = smul.addr %s1057, 32
          %s1059 = scalar_lea.vmem [#allocation13], %s1058
          %1061 = dma.done %s1056, 512
        $region92: #{tpu_custom_call.1} parent=87 // pred_fallthru
          _
      $region88: #{tpu_custom_call.1} parent=5 // pred_fallthru
        _
    $region6: #{tpu_custom_call.1} parent=1 // loop_footer
      %s28 = sadd.s32 1, %s24
    $region7: #{tpu_custom_call.1} parent=1 // loop_footer_branch
      %23 = sbr.rel target = $region3
    $region8: #{tpu_custom_call.1} parent=1 // loop_exit
      _
    %1062 = vsyncpa [#allocation3], 1
    %s1063 = scalar_lea.sflag [#allocation3], 1
    %1064 = vsyncpa %s1063, 1
    %1065 = vsyncpa [#allocation6], 1
    %1066 = vsyncpa [#allocation9], 1
    %1067 = vsyncpa [#allocation12], 1
    %1068 = vsyncpa [#allocation4], 1
    %s1069 = scalar_lea.sflag [#allocation4], 1
    %1070 = vsyncpa %s1069, 1

</llo_original>
